<compile_context>
chip_gen: v7x
topology: tpu7x:2x2x1
jax: 0.10.0
libtpu: 0.0.40
codegen_flags: <defaults>
</compile_context>

<pallas_src>
import functools

import jax
import jax.numpy as jnp
from jax import lax
from jax.experimental import pallas as pl
from jax.experimental.pallas import tpu as pltpu

GAMMA = 2.0  # module default; the kernel specializes exp(g*logsigmoid) = sigmoid**2


def _focal_loss_kernel(logit_ref, target_ref, partial_ref, *, n_rows):
    tile_rows = logit_ref.shape[0]

    logit = logit_ref[...].astype(jnp.float32)
    target = target_ref[...].astype(jnp.float32)

    # Stable BCE-with-logits (algebraically identical to the PyTorch formula
    # logit - logit*t + max(-logit,0) + log(exp(-max) + exp(-logit-max))):
    #   bce = max(logit, 0) - logit*t + log(1 + exp(-|logit|))
    e = jnp.exp(-jnp.abs(logit))                              # 1 EUP exp
    bce = jnp.maximum(logit, 0.0) - logit * target + jnp.log(1.0 + e)  # 1 EUP log

    # Focal modulation: exp(gamma * logsigmoid(z)) with gamma == 2
    #   == sigmoid(z)**2, computed stably (works for soft targets too).
    z = -logit * (target * 2.0 - 1.0)
    ez = jnp.exp(-jnp.abs(z))                                 # 1 EUP exp
    sig = jnp.where(z >= 0.0, 1.0, ez) / (1.0 + ez)           # sigmoid(z)
    loss = (sig * sig) * bce

    # Mask out padded rows of the last (ragged) tile.
    row = (pl.program_id(0) * tile_rows
           + lax.broadcasted_iota(jnp.int32, loss.shape, 0))
    loss = jnp.where(row < n_rows, loss, 0.0)

    # Cheap sublane (row) reduction only; the cross-tile/cross-lane reduction
    # and the divide-by-N happen once, outside the kernel.
    partial_ref[...] = jnp.sum(loss, axis=0, keepdims=True)


def _round_down_mult(x, m):
    return max(m, (x // m) * m)


def focal_loss(logit, target, *, max_tile_rows=512, block_budget_bytes=2 << 20):
    """Pallas implementation of FocalLoss(gamma=2).forward for 2-D inputs."""
    assert logit.ndim == 2 and logit.shape == target.shape
    N, C = logit.shape

    # Pick the largest row tile that keeps each input block within a modest
    # VMEM budget (2 inputs x 2 pipeline buffers fit every generation's
    # scoped VMEM, including v7x's 64 MiB / v5e's 16 MiB defaults).
    bytes_per_row = C * 4  # worst case (f32)
    tile_rows = min(max_tile_rows, max(8, block_budget_bytes // bytes_per_row))
    tile_rows = _round_down_mult(min(tile_rows, N), 8)
    num_tiles = pl.cdiv(N, tile_rows)

    kernel = functools.partial(_focal_loss_kernel, n_rows=N)

    partials = pl.pallas_call(
        kernel,
        out_shape=jax.ShapeDtypeStruct((num_tiles, C), jnp.float32),
        grid_spec=pltpu.PrefetchScalarGridSpec(
            num_scalar_prefetch=0,
            grid=(num_tiles,),
            in_specs=[
                pl.BlockSpec((tile_rows, C), lambda i: (i, 0)),
                pl.BlockSpec((tile_rows, C), lambda i: (i, 0)),
            ],
            out_specs=pl.BlockSpec((1, C), lambda i: (i, 0)),
        ),
        compiler_params=pltpu.CompilerParams(
            dimension_semantics=("parallel",)),
    )(logit, target)

    # Tiny epilogue: sum over tiles and classes, mean over batch rows.
    return jnp.sum(partials) / jnp.float32(N)


def focal_loss_ref(logit, target, gamma=GAMMA):
    """Pure-JAX mirror of the PyTorch module."""
    logit = logit.astype(jnp.float32)
    target = target.astype(jnp.float32)
    max_val = jnp.maximum(-logit, 0.0)
    loss = (logit - logit * target + max_val
            + jnp.log(jnp.exp(-max_val) + jnp.exp(-logit - max_val)))
    invprobs = jax.nn.log_sigmoid(-logit * (target * 2.0 - 1.0))
    loss = jnp.exp(invprobs * gamma) * loss
    loss = loss.sum(axis=1)
    return loss.mean()


if __name__ == "__main__":
    key = jax.random.PRNGKey(0)
    k1, k2, k3, k4 = jax.random.split(key, 4)

    # Small shapes consistent with a 2-D (batch, classes) classification loss.
    N, C = 16, 128
    logit = jax.random.normal(k1, (N, C), dtype=jnp.float32) * 2.0
    target = jax.random.bernoulli(k2, 0.3, (N, C)).astype(jnp.float32)

    out = focal_loss(logit, target)
    out = jax.block_until_ready(out)
    ref = focal_loss_ref(logit, target)
    assert jnp.allclose(out, ref, rtol=1e-5, atol=1e-5), (out, ref)

    # Ragged batch (exercises the row-mask path).
    N2, C2 = 20, 256
    logit2 = jax.random.normal(k3, (N2, C2), dtype=jnp.float32) * 3.0
    target2 = jax.random.bernoulli(k4, 0.5, (N2, C2)).astype(jnp.float32)
    out2 = jax.block_until_ready(focal_loss(logit2, target2))
    ref2 = focal_loss_ref(logit2, target2)
    assert jnp.allclose(out2, ref2, rtol=1e-5, atol=1e-5), (out2, ref2)

    print("KERNEL_OK")
</pallas_src>

<mosaic_0001>
module attributes {stable_mosaic.version = 11 : i64} {
  func.func @_focal_loss_kernel(%arg0: i32, %arg1: memref<16x128xf32, #tpu.memory_space<vmem>>, %arg2: memref<16x128xf32, #tpu.memory_space<vmem>>, %arg3: memref<1x128xf32, #tpu.memory_space<vmem>>) attributes {dimension_semantics = [#tpu.dimension_semantics<parallel>], iteration_bounds = array<i64: 1>, scalar_prefetch = 0 : i64, scratch_operands = 0 : i64, tpu.core_type = #tpu.core_type<tc>, window_params = [{transform_indices = @transform_0, window_bounds = array<i64: 16, 128>}, {transform_indices = @transform_1, window_bounds = array<i64: 16, 128>}, {transform_indices = @transform_2, window_bounds = array<i64: 1, 128>}]} {
    %c0 = arith.constant 0 : index
    %c0_0 = arith.constant 0 : index
    %0 = vector.load %arg1[%c0, %c0_0] : memref<16x128xf32, #tpu.memory_space<vmem>>, vector<16x128xf32>
    %c0_1 = arith.constant 0 : index
    %c0_2 = arith.constant 0 : index
    %1 = vector.load %arg2[%c0_1, %c0_2] : memref<16x128xf32, #tpu.memory_space<vmem>>, vector<16x128xf32>
    %2 = math.absf %0 : vector<16x128xf32>
    %cst = arith.constant 0.000000e+00 : f32
    %3 = vector.broadcast %cst : f32 to vector<16x128xf32>
    %4 = arith.subf %3, %2 : vector<16x128xf32>
    %5 = math.exp %4 : vector<16x128xf32>
    %cst_3 = arith.constant 0.000000e+00 : f32
    %6 = vector.broadcast %cst_3 : f32 to vector<16x128xf32>
    %7 = arith.maximumf %0, %6 : vector<16x128xf32>
    %8 = arith.mulf %0, %1 : vector<16x128xf32>
    %9 = arith.subf %7, %8 : vector<16x128xf32>
    %cst_4 = arith.constant 1.000000e+00 : f32
    %10 = vector.broadcast %cst_4 : f32 to vector<16x128xf32>
    %11 = arith.addf %10, %5 : vector<16x128xf32>
    %12 = math.log %11 : vector<16x128xf32>
    %13 = arith.addf %9, %12 : vector<16x128xf32>
    %cst_5 = arith.constant 0.000000e+00 : f32
    %14 = vector.broadcast %cst_5 : f32 to vector<16x128xf32>
    %15 = arith.subf %14, %0 : vector<16x128xf32>
    %cst_6 = arith.constant 2.000000e+00 : f32
    %16 = vector.broadcast %cst_6 : f32 to vector<16x128xf32>
    %17 = arith.mulf %1, %16 : vector<16x128xf32>
    %cst_7 = arith.constant 1.000000e+00 : f32
    %18 = vector.broadcast %cst_7 : f32 to vector<16x128xf32>
    %19 = arith.subf %17, %18 : vector<16x128xf32>
    %20 = arith.mulf %15, %19 : vector<16x128xf32>
    %21 = math.absf %20 : vector<16x128xf32>
    %cst_8 = arith.constant 0.000000e+00 : f32
    %22 = vector.broadcast %cst_8 : f32 to vector<16x128xf32>
    %23 = arith.subf %22, %21 : vector<16x128xf32>
    %24 = math.exp %23 : vector<16x128xf32>
    %cst_9 = arith.constant 0.000000e+00 : f32
    %25 = vector.broadcast %cst_9 : f32 to vector<16x128xf32>
    %26 = arith.cmpf oge, %20, %25 : vector<16x128xf32>
    %cst_10 = arith.constant 1.000000e+00 : f32
    %27 = vector.broadcast %cst_10 : f32 to vector<16x128xf32>
    %28 = arith.select %26, %27, %24 : vector<16x128xi1>, vector<16x128xf32>
    %cst_11 = arith.constant 1.000000e+00 : f32
    %29 = vector.broadcast %cst_11 : f32 to vector<16x128xf32>
    %30 = arith.addf %29, %24 : vector<16x128xf32>
    %31 = arith.divf %28, %30 : vector<16x128xf32>
    %32 = arith.mulf %31, %31 : vector<16x128xf32>
    %33 = arith.mulf %32, %13 : vector<16x128xf32>
    %c16_i32 = arith.constant 16 : i32
    %34 = arith.muli %arg0, %c16_i32 : i32
    %35 = tpu.iota {dimensions = array<i32: 0>} : vector<16x128xi32>
    %36 = vector.broadcast %34 : i32 to vector<16x128xi32>
    %37 = arith.addi %36, %35 : vector<16x128xi32>
    %c16_i32_12 = arith.constant 16 : i32
    %38 = vector.broadcast %c16_i32_12 : i32 to vector<16x128xi32>
    %39 = arith.cmpi slt, %37, %38 : vector<16x128xi32>
    %cst_13 = arith.constant 0.000000e+00 : f32
    %40 = vector.broadcast %cst_13 : f32 to vector<16x128xf32>
    %41 = arith.select %39, %33, %40 : vector<16x128xi1>, vector<16x128xf32>
    %cst_14 = arith.constant dense<0.000000e+00> : vector<128xf32>
    %42 = vector.multi_reduction <add>, %41, %cst_14 [0] : vector<16x128xf32> to vector<128xf32>
    %43 = vector.shape_cast %42 : vector<128xf32> to vector<1x128xf32>
    %c0_15 = arith.constant 0 : index
    %c0_16 = arith.constant 0 : index
    %44 = vector.load %arg3[%c0_15, %c0_16] : memref<1x128xf32, #tpu.memory_space<vmem>>, vector<1x128xf32>
    tpu.vector_store %arg3[%c0_15, %c0_16], %43 {strides = array<i32>} : memref<1x128xf32, #tpu.memory_space<vmem>>, vector<1x128xf32>,
    return
  }
  func.func @transform_0(%arg0: i32) -> (i32, i32) {
    %c0_i32 = arith.constant 0 : i32
    %c0_i32_0 = arith.constant 0 : i32
    return %arg0, %c0_i32 : i32, i32
  }
  func.func @transform_1(%arg0: i32) -> (i32, i32) {
    %c0_i32 = arith.constant 0 : i32
    %c0_i32_0 = arith.constant 0 : i32
    return %arg0, %c0_i32 : i32, i32
  }
  func.func @transform_2(%arg0: i32) -> (i32, i32) {
    %c0_i32 = arith.constant 0 : i32
    %c0_i32_0 = arith.constant 0 : i32
    return %arg0, %c0_i32 : i32, i32
  }
}

</mosaic_0001>

<llo_original>
// kernel: tpu_custom_call.1
$region0: #{tpu_custom_call.1}
  #allocation0 [shape = 'u32[]', space=smem, size = 0x4, offset = 0x4, fixed_abs, tag = 'smem constant byte address 0x4 - core index']
  #allocation1 [shape = 'u32[144,128]{1,0:T(1,128)}', space=vmem, size = 0x12000, scoped, tag = 'internal scratch']
  %s0 = inlined_call_operand.hbm [shape: f32[16,128], index: 0, kind: input, shape index: {}]
  %s1 = inlined_call_operand.hbm [shape: f32[16,128], index: 1, kind: input, shape index: {}]
  %s2 = inlined_call_operand.hbm [shape: f32[1,128], index: 2, kind: output, shape index: {}]
  %s3 = sld [smem:[#allocation0]]
  $region26: #{tpu_custom_call.1} parent=0
    _
  %s5 = ssub.s32 1, %s3
  %s6 = scalar_select 0, %s5, %s3
  $region1: #{tpu_custom_call.1} parent=0
    #allocation2 [shape = 'u8[8192]{0}', space=vmem, size = 0x2000, scoped, tag = 'input window, operand 0, single buffered']
    #allocation3 [shape = 's32[1]{0}', space=sflag, size = 0x4, scoped, tag = 'scoped memory for tpu_custom_call.1']
    #allocation4 [shape = 's32[1]{0}', space=sflag, size = 0x4, scoped, tag = 'scoped memory for tpu_custom_call.1']
    #allocation5 [shape = 'u8[8192]{0}', space=vmem, size = 0x2000, scoped, tag = 'input window, operand 1, single buffered']
    #allocation6 [shape = 's32[1]{0}', space=sflag, size = 0x4, scoped, tag = 'scoped memory for tpu_custom_call.1']
    #allocation7 [shape = 'u8[512]{0}', space=vmem, size = 0x400, scoped, tag = 'output window, operand 0, single buffered']
    %7 = vsyncpa [#allocation3], 0
    %8 = vsyncpa [#allocation6], 0
    %9 = vsyncpa [#allocation4], 0
    // Predicated region
    $region2: #{tpu_custom_call.1} parent=1 // pred_check
      _
    $region3: #{tpu_custom_call.1} parent=1 // pred_check_branch
      %11 = sbr.rel (0) target = $region5
    $region4: #{tpu_custom_call.1} parent=1 // pred_region
      %s13 = ssub.s32 256, 256
      %14 = vsyncadd [#allocation3], %s13
      %s15 = sshll.u32 [#allocation2], 4
      %s16 = int_to_ptr.vmem [resolvable:$true] %s15
      %21 = dma.hbm_to_vmem [thread:$0]  %s0, 256, %s16, [#allocation3], 128, 128, 8
    $region5: #{tpu_custom_call.1} parent=1 // pred_fallthru
      _
    // Predicated region
    $region6: #{tpu_custom_call.1} parent=1 // pred_check
      _
    $region7: #{tpu_custom_call.1} parent=1 // pred_check_branch
      %23 = sbr.rel (0) target = $region9
    $region8: #{tpu_custom_call.1} parent=1 // pred_region
      %s25 = ssub.s32 256, 256
      %26 = vsyncadd [#allocation6], %s25
      %s27 = sshll.u32 [#allocation5], 4
      %s28 = int_to_ptr.vmem [resolvable:$true] %s27
      %33 = dma.hbm_to_vmem [thread:$0]  %s1, 256, %s28, [#allocation6], 128, 128, 8
    $region9: #{tpu_custom_call.1} parent=1 // pred_fallthru
      _
    // Predicated region
    $region10: #{tpu_custom_call.1} parent=1 // pred_check
      _
    $region11: #{tpu_custom_call.1} parent=1 // pred_check_branch
      %35 = sbr.rel (0) target = $region13
    $region12: #{tpu_custom_call.1} parent=1 // pred_region
      %36 = dma.done [#allocation3], 256
    $region13: #{tpu_custom_call.1} parent=1 // pred_fallthru
      _
    // Predicated region
    $region14: #{tpu_custom_call.1} parent=1 // pred_check
      _
    $region15: #{tpu_custom_call.1} parent=1 // pred_check_branch
      %38 = sbr.rel (0) target = $region17
    $region16: #{tpu_custom_call.1} parent=1 // pred_region
      %39 = dma.done [#allocation6], 256
    $region17: #{tpu_custom_call.1} parent=1 // pred_fallthru
      _
    %v40 = vld [vmem:[#allocation2] sm:$0xff]
    %v41 = vld [vmem:[#allocation2 + $0x8] sm:$0xff]
    %v42 = vld [vmem:[#allocation5] sm:$0xff]
    %v43 = vld [vmem:[#allocation5 + $0x8] sm:$0xff]
    %v44 = vand.u32 2147483647, %v40
    %v45 = vand.u32 2147483647, %v41
    %v46 = vsub.f32 0.0, %v44
    %v47 = vsub.f32 0.0, %v45
    %v48 = vmul.f32 %v46, 1.442695
    %v49 = vpow.pop %v48
    %v50 = vmul.f32 %v47, 1.442695
    %v51 = vpow.pop %v50
    %v52 = vmax.f32 %v40, 0.0
    %v53 = vmax.f32 %v41, 0.0
    %v54 = vmul.f32 %v40, %v42
    %v55 = vmul.f32 %v41, %v43
    %v56 = vsub.f32 %v52, %v54
    %v57 = vsub.f32 %v53, %v55
    %v58 = vadd.f32 %v49, 1.0
    %v59 = vadd.f32 %v51, 1.0
    %v60 = vlog2.pop %v58
    %v61 = vmul.f32 %v60, 0.6931472
    %v62 = vlog2.pop %v59
    %v63 = vmul.f32 %v62, 0.6931472
    %v64 = vadd.f32 %v56, %v61
    %v65 = vadd.f32 %v57, %v63
    %v66 = vsub.f32 0.0, %v40
    %v67 = vsub.f32 0.0, %v41
    %v68 = vmul.f32 %v42, 2.0
    %v69 = vmul.f32 %v43, 2.0
    %v70 = vsub.f32 %v68, 1.0
    %v71 = vsub.f32 %v69, 1.0
    %v72 = vmul.f32 %v66, %v70
    %v73 = vmul.f32 %v67, %v71
    %v74 = vand.u32 2147483647, %v72
    %v75 = vand.u32 2147483647, %v73
    %v76 = vsub.f32 0.0, %v74
    %v77 = vsub.f32 0.0, %v75
    %v78 = vmul.f32 %v76, 1.442695
    %v79 = vpow.pop %v78
    %v80 = vmul.f32 %v77, 1.442695
    %v81 = vpow.pop %v80
    %vm82 = vcmp.ge.f32.partialorder %v72, 0.0
    %vm83 = vcmp.ge.f32.partialorder %v73, 0.0
    %v84 = vsel %vm82, 1.0, %v79
    %v85 = vsel %vm83, 1.0, %v81
    %v86 = vadd.f32 %v79, 1.0
    %v87 = vadd.f32 %v81, 1.0
    %v88 = vrcp.pop %v86
    %v89 = vmul.f32 %v84, %v88
    %v90 = vrcp.pop %v87
    %v91 = vmul.f32 %v85, %v90
    %v92 = vmul.f32 %v89, %v89
    %v93 = vmul.f32 %v91, %v91
    %v94 = vmul.f32 %v92, %v64
    %v95 = vmul.f32 %v93, %v65
    %s96 = smul.u32 0, 16
    %v97 = vlaneseq
    %v98 = vshrl.u32 %v97, 7
    %v99 = vadd.s32 %v98, 8
    %v100 = vstv %s96
    %v101 = vadd.s32 %v100, %v98
    %v102 = vadd.s32 %v100, %v99
    %vm103 = vcmp.lt.s32.totalorder %v101, 16
    %vm104 = vcmp.lt.s32.totalorder %v102, 16
    %v105 = vsel %vm103, %v94, 0.0
    %v106 = vsel %vm104, %v95, 0.0
    %v107 = vadd.f32 %v105, %v106
    %v108 = vrot.slane %v107, 4
    %v109 = vadd.f32 %v107, %v108
    %v110 = vrot.slane %v109, 2
    %v111 = vadd.f32 %v109, %v110
    %v112 = vrot.slane %v111, 1
    %v113 = vadd.f32 %v111, %v112
    %114 = vst [vmem:[#allocation7] sm:$0x1] %v113
    // Predicated region
    $region18: #{tpu_custom_call.1} parent=1 // pred_check
      _
    $region19: #{tpu_custom_call.1} parent=1 // pred_check_branch
      %116 = sbr.rel (0) target = $region21
    $region20: #{tpu_custom_call.1} parent=1 // pred_region
      %s118 = ssub.s32 16, 16
      %119 = vsyncadd [#allocation4], %s118
      %s121 = sshll.u32 [#allocation7], 4
      %s122 = int_to_ptr.vmem [resolvable:$true] %s121
      %124 = dma.vmem_to_hbm [thread:$0]  %s122, 16, %s2, [#allocation4]
    $region21: #{tpu_custom_call.1} parent=1 // pred_fallthru
      _
    // Predicated region
    $region22: #{tpu_custom_call.1} parent=1 // pred_check
      _
    $region23: #{tpu_custom_call.1} parent=1 // pred_check_branch
      %126 = sbr.rel (0) target = $region25
    $region24: #{tpu_custom_call.1} parent=1 // pred_region
      %127 = dma.done [#allocation4], 16
    $region25: #{tpu_custom_call.1} parent=1 // pred_fallthru
      _
    %128 = vsyncpa [#allocation3], 1
    %129 = vsyncpa [#allocation6], 1
    %130 = vsyncpa [#allocation4], 1

</llo_original>
